<compile_context>
chip_gen: v6e
topology: v6e:2x2x1
jax: 0.10.0
libtpu: 0.0.40
codegen_flags: <defaults>
</compile_context>

<pallas_src>
import functools
import math

import numpy as np
import jax
import jax.numpy as jnp
from jax.experimental import pallas as pl
from jax.experimental.pallas import tpu as pltpu


# ----------------------------------------------------------------------------
# Small helpers
# ----------------------------------------------------------------------------
def _cdiv(a: int, b: int) -> int:
    return -(-a // b)


def _round_up(a: int, b: int) -> int:
    return _cdiv(a, b) * b


@functools.lru_cache(maxsize=None)
def _vmem_capacity_bytes() -> int:
    """Per-TensorCore VMEM capacity; conservative v7x value if the query fails."""
    try:
        cap = int(pltpu.get_tpu_info().vmem_capacity_bytes)
        if cap >= (16 << 20):
            return cap
    except Exception:
        pass
    return 64 << 20  # v7x per-TC; v5e/v6e have 128 MiB (detected above when possible)


# ----------------------------------------------------------------------------
# Host-side glue: bilinear (half-pixel center) interpolation matrices.
# ----------------------------------------------------------------------------
def _bilinear_matrix(in_size: int, out_size: int) -> np.ndarray:
    """cv2-style bilinear interpolation matrix, shape [out_size, in_size] (f64)."""
    w = np.zeros((out_size, in_size), dtype=np.float64)
    scale = in_size / out_size
    for d in range(out_size):
        src = (d + 0.5) * scale - 0.5
        src = min(max(src, 0.0), in_size - 1.0)
        i0 = min(int(np.floor(src)), in_size - 1)
        i1 = min(i0 + 1, in_size - 1)
        frac = src - i0
        w[d, i0] += 1.0 - frac
        w[d, i1] += frac
    return w


def _fold_factor(k_in: int, k_out: int, w_itemsize: int, weight_budget: int) -> int:
    """Rows-per-fold so f*k_out is 128-lane dense (and ideally f*k_in too)."""
    def wbytes(f: int) -> int:
        return (f * k_in) * (f * k_out) * w_itemsize

    f = 128 // math.gcd(k_out, 128)          # smallest f with f*k_out % 128 == 0
    # Shrink only if even the minimal lane-dense fold's weight cannot fit (rare).
    while f > 1 and wbytes(f) > weight_budget:
        f //= 2
    # Boost so the folded K (input width) is also 128-dense, while the
    # block-diagonal weight stays cheap.
    while (f * k_in) % 128 != 0 and f < 128 and wbytes(2 * f) <= weight_budget:
        f *= 2
    return max(f, 1)


# ----------------------------------------------------------------------------
# Pallas kernel: one lane-dense MXU matmul per block of folded channel rows.
#   x_ref : (TB, Kin_f)   w_ref : (Kin_f, Kout_f)   o_ref : (TB, Kout_f)
# ----------------------------------------------------------------------------
def _folded_resize_kernel(x_ref, w_ref, o_ref):
    x = x_ref[...]
    w = w_ref[...]
    if x.dtype != w.dtype:
        # In-kernel cast for non-native input dtypes (hidden under the matmul).
        x = x.astype(w.dtype)
    o_ref[...] = jnp.dot(x, w, preferred_element_type=jnp.float32).astype(o_ref.dtype)


def _lane_dense_resize_matmul(x2d: jax.Array, wc_np: np.ndarray, out_dtype) -> jax.Array:
    """(rows, K_in) @ (K_in, K_out) resize matmul, folded so stores are 128-lane dense."""
    rows, k_in = x2d.shape
    assert wc_np.shape[0] == k_in
    k_out = wc_np.shape[1]

    x_itemsize = jnp.dtype(x2d.dtype).itemsize
    w_dtype = jnp.bfloat16 if x2d.dtype == jnp.bfloat16 else jnp.float32
    w_itemsize = jnp.dtype(w_dtype).itemsize
    out_itemsize = jnp.dtype(out_dtype).itemsize

    vmem_cap = _vmem_capacity_bytes()
    budget = (vmem_cap * 3) // 4            # per-generation budget with headroom

    # ---- fold f rows per matmul row for lane density ------------------------
    f = _fold_factor(k_in, k_out, w_itemsize, weight_budget=budget // 4)
    rows_p = _round_up(rows, f)
    if rows_p != rows:
        x2d = jnp.pad(x2d, ((0, rows_p - rows), (0, 0)))   # rare; zero rows are sliced off
    rf = rows_p // f
    kin_f, kout_f = f * k_in, f * k_out

    w_np = np.kron(np.eye(f), wc_np) if f > 1 else wc_np   # block-diagonal fold of Wc
    w_arr = jnp.asarray(w_np, dtype=w_dtype)
    w_bytes = kin_f * kout_f * w_itemsize

    x2f = x2d.reshape(rf, kin_f)                            # free, contiguous reshape

    # ---- block-row sizing: byte target, VMEM budget, dual-TC split ----------
    per_row_bytes = 2 * (kin_f * x_itemsize + kout_f * out_itemsize)  # dbl-buffered in+out
    io_budget = max(budget - 2 * w_bytes, per_row_bytes * 8)
    tb = max(_cdiv(4 << 20, kin_f * x_itemsize), 8)         # ~4 MiB of input per buffer
    tb = min(tb, max(io_budget // per_row_bytes, 8), rf)

    min_itemsize = min(x_itemsize, out_itemsize)
    align = 8 if min_itemsize >= 4 else (16 if min_itemsize == 2 else 32)

    if tb >= rf:
        tb = rf
        # Keep an even number of grid steps when each half still moves >= ~1 MiB,
        # so v7x's two TensorCores both get work on the "parallel" axis.
        if rf >= 2 * align:
            half = _round_up(_cdiv(rf, 2), align)
            if half < rf and half * kin_f * x_itemsize >= (1 << 20):
                tb = half
    else:
        tb = max((tb // align) * align, align)              # sublane-aligned partial blocks
        tb = min(tb, rf)

    grid = (_cdiv(rf, tb),)

    vmem_need = tb * per_row_bytes + 2 * w_bytes + (2 << 20)
    # Sized to fit by construction; never clamp the limit below what blocks need.
    vmem_limit = int(min(max(vmem_need, 16 << 20), vmem_cap))

    out_f = pl.pallas_call(
        _folded_resize_kernel,
        out_shape=jax.ShapeDtypeStruct((rf, kout_f), out_dtype),
        grid_spec=pltpu.PrefetchScalarGridSpec(
            num_scalar_prefetch=0,
            grid=grid,
            in_specs=[
                pl.BlockSpec((tb, kin_f), lambda i: (i, 0)),       # contiguous, lane-dense
                # TODO(synk): single-buffer this grid-invariant weight (pl.Buffered(1) or a
                # memory_space-only VMEM spec) once validated on the target jax version.
                pl.BlockSpec((kin_f, kout_f), lambda i: (0, 0)),   # resident weight
            ],
            out_specs=pl.BlockSpec((tb, kout_f), lambda i: (i, 0)),
        ),
        compiler_params=pltpu.CompilerParams(
            dimension_semantics=("parallel",),
            vmem_limit_bytes=vmem_limit,
        ),
    )(x2f, w_arr)

    out2d = out_f.reshape(rows_p, k_out)                    # unfold (free, row-major)
    if rows_p != rows:
        out2d = out2d[:rows]
    return out2d


# ----------------------------------------------------------------------------
# Public resize entry point
# ----------------------------------------------------------------------------
def roi_pool_resize(x: jax.Array, output_shape, *, force_separable: bool = False) -> jax.Array:
    """x: [N, C, H_in, W_in] -> [N, C, H_out, W_out] bilinear resize (Pallas kernels)."""
    n, c, h_in, w_in = x.shape
    h_out, w_out = int(output_shape[0]), int(output_shape[1])
    nc = n * c
    hw_in, hw_out = h_in * w_in, h_out * w_out

    orig_dtype = x.dtype
    if (h_in, w_in) == (h_out, w_out):
        return x                                           # same-size bilinear is the identity

    out_dtype = orig_dtype if orig_dtype in (jnp.float32, jnp.bfloat16) else jnp.float32

    wh = _bilinear_matrix(h_in, h_out)                     # (h_out, h_in)
    ww = _bilinear_matrix(w_in, w_out)                     # (w_out, w_in)

    w_itemsize = 2 if orig_dtype == jnp.bfloat16 else 4
    budget = (_vmem_capacity_bytes() * 3) // 4
    f_min = 128 // math.gcd(hw_out, 128)
    direct_w_bytes = (f_min * hw_in) * (f_min * hw_out) * w_itemsize
    use_direct = (direct_w_bytes <= budget // 4) and not force_separable

    if use_direct:
        # Whole resize as one lane-dense MXU matmul: out = x_flat @ kron(Wh, Ww)^T.
        wc = np.kron(wh, ww).T                             # (hw_in, hw_out)
        out2 = _lane_dense_resize_matmul(x.reshape(nc, hw_in), wc, out_dtype)
        out = out2.reshape(n, c, h_out, w_out)
    else:
        # Separable two-pass fallback for large spatial shapes: the dense kron
        # weight would blow past VMEM, the two 1-D weights stay KB-sized.
        y = _lane_dense_resize_matmul(x.reshape(nc * h_in, w_in), ww.T, jnp.float32)
        y = y.reshape(nc, h_in, w_out).transpose(0, 2, 1).reshape(nc * w_out, h_in)
        z = _lane_dense_resize_matmul(y, wh.T, out_dtype)
        # TODO(synk): fold these two XLA transposes into the Pallas passes (strided
        # block index_maps) to drop two extra HBM round-trips on this rare path.
        out = z.reshape(nc, w_out, h_out).transpose(0, 2, 1).reshape(n, c, h_out, w_out)

    if out.dtype != orig_dtype:
        out = out.astype(orig_dtype)
    return out


class RoiPoolPallas:
    """JAX/Pallas equivalent of RoiPool."""

    def __init__(self, reference_tensor: jax.Array, method: str = "resize"):
        self.up1 = reference_tensor
        self.output_shape = tuple(int(s) for s in reference_tensor.shape[2:])
        assert len(self.output_shape) == 2
        self.method = method

    @staticmethod
    def adaptive_padding(up1, up2):
        hw1, hw2 = tuple(up1.shape[2:]), tuple(up2.shape[2:])
        assert hw1[0] >= hw2[0] and hw1[1] >= hw2[1]
        single_offset = [(a - b) // 2 for a, b in zip(hw1, hw2)]
        leftout = [(a - b) % 2 for a, b in zip(hw1, hw2)]
        # (left, right, top, bottom) - same convention as nn.ZeroPad2d.
        return (single_offset[1] + leftout[1], single_offset[1],
                single_offset[0] + leftout[0], single_offset[0])

    def __call__(self, input_tensor: jax.Array) -> jax.Array:
        if self.method == "resize":
            out = roi_pool_resize(input_tensor, self.output_shape)
            assert out.shape == tuple(input_tensor.shape[:2]) + self.output_shape
            return out
        # Zero-pad branch: pure data movement, plain JAX glue (not a hot path).
        left, right, top, bottom = self.adaptive_padding(self.up1, input_tensor)
        return jnp.pad(input_tensor, ((0, 0), (0, 0), (top, bottom), (left, right)))


if __name__ == "__main__":
    key = jax.random.PRNGKey(0)
    k1, k2, k3, k4 = jax.random.split(key, 4)

    # Reference tensor defines the output spatial shape (8, 8).
    reference = jax.random.normal(k1, (2, 4, 8, 8), dtype=jnp.float32)
    pool = RoiPoolPallas(reference, method="resize")

    # --- f32 downsample: (2, 4, 16, 16) -> (2, 4, 8, 8)  (fold f=2) ----------
    x = jax.random.normal(k2, (2, 4, 16, 16), dtype=jnp.float32)
    out = jax.block_until_ready(pool(x))
    wh = jnp.asarray(_bilinear_matrix(16, 8), jnp.float32)
    ww = jnp.asarray(_bilinear_matrix(16, 8), jnp.float32)
    ref = jnp.einsum("oh,nchw,pw->ncop", wh, x, ww)
    assert out.shape == (2, 4, 8, 8) and out.dtype == x.dtype
    np.testing.assert_allclose(np.asarray(out), np.asarray(ref), rtol=1e-4, atol=1e-5)

    # --- f32 upsample: (2, 12, 4, 4) -> (2, 12, 8, 8)  (fold f=8) ------------
    x_up = jax.random.normal(k3, (2, 12, 4, 4), dtype=jnp.float32)
    out_up = jax.block_until_ready(pool(x_up))
    wh_u = jnp.asarray(_bilinear_matrix(4, 8), jnp.float32)
    ww_u = jnp.asarray(_bilinear_matrix(4, 8), jnp.float32)
    ref_up = jnp.einsum("oh,nchw,pw->ncop", wh_u, x_up, ww_u)
    assert out_up.shape == (2, 12, 8, 8)
    np.testing.assert_allclose(np.asarray(out_up), np.asarray(ref_up), rtol=1e-4, atol=1e-5)

    # --- separable two-pass fallback (forced) on the same small shape --------
    out_sep = jax.block_until_ready(roi_pool_resize(x, (8, 8), force_separable=True))
    np.testing.assert_allclose(np.asarray(out_sep), np.asarray(ref), rtol=1e-4, atol=1e-5)

    # --- bf16 I/O path (native dtype end-to-end; weight in bf16) -------------
    x_bf = jax.random.normal(k4, (2, 4, 16, 16), dtype=jnp.bfloat16)
    out_bf = jax.block_until_ready(pool(x_bf))
    ref_bf = jnp.einsum("oh,nchw,pw->ncop", wh, x_bf.astype(jnp.float32), ww)
    assert out_bf.shape == (2, 4, 8, 8) and out_bf.dtype == jnp.bfloat16
    np.testing.assert_allclose(np.asarray(out_bf, dtype=np.float32), np.asarray(ref_bf),
                               rtol=5e-2, atol=5e-2)

    # --- zero-pad branch sanity ----------------------------------------------
    pool_pad = RoiPoolPallas(reference, method="pad")
    small = jax.random.normal(k2, (2, 4, 5, 6), dtype=jnp.float32)
    padded = jax.block_until_ready(pool_pad(small))
    assert padded.shape == (2, 4, 8, 8)

    print("KERNEL_OK")
</pallas_src>

<mosaic_0001>
module attributes {stable_mosaic.version = 11 : i64} {
  func.func @_folded_resize_kernel(%arg0: i32, %arg1: memref<4x512xf32, #tpu.memory_space<vmem>>, %arg2: memref<512x128xf32, #tpu.memory_space<vmem>>, %arg3: memref<4x128xf32, #tpu.memory_space<vmem>>) attributes {dimension_semantics = [#tpu.dimension_semantics<parallel>], iteration_bounds = array<i64: 1>, scalar_prefetch = 0 : i64, scratch_operands = 0 : i64, tpu.core_type = #tpu.core_type<tc>, window_params = [{transform_indices = @transform_0, window_bounds = array<i64: 4, 512>}, {pipeline_mode = #tpu.pipeline_mode<synchronous>, transform_indices = @transform_1, window_bounds = array<i64: 512, 128>}, {transform_indices = @transform_2, window_bounds = array<i64: 4, 128>}]} {
    %c0 = arith.constant 0 : index
    %c0_0 = arith.constant 0 : index
    %0 = vector.load %arg1[%c0, %c0_0] : memref<4x512xf32, #tpu.memory_space<vmem>>, vector<4x512xf32>
    %c0_1 = arith.constant 0 : index
    %c0_2 = arith.constant 0 : index
    %1 = vector.load %arg2[%c0_1, %c0_2] : memref<512x128xf32, #tpu.memory_space<vmem>>, vector<512x128xf32>
    %cst = arith.constant dense<0.000000e+00> : vector<4x128xf32>
    %2 = tpu.matmul %0, %1, %cst {dimension_numbers = #tpu.dot_dimension_numbers<[1], [0], [0], [1], [0, 0, 1, 1], [], []>} : vector<4x512xf32>, vector<512x128xf32>, vector<4x128xf32> -> vector<4x128xf32>
    %c0_3 = arith.constant 0 : index
    %c0_4 = arith.constant 0 : index
    %3 = vector.load %arg3[%c0_3, %c0_4] : memref<4x128xf32, #tpu.memory_space<vmem>>, vector<4x128xf32>
    tpu.vector_store %arg3[%c0_3, %c0_4], %2 {strides = array<i32>} : memref<4x128xf32, #tpu.memory_space<vmem>>, vector<4x128xf32>,
    return
  }
  func.func @transform_0(%arg0: i32) -> (i32, i32) {
    %c0_i32 = arith.constant 0 : i32
    %c0_i32_0 = arith.constant 0 : i32
    return %arg0, %c0_i32 : i32, i32
  }
  func.func @transform_1(%arg0: i32) -> (i32, i32) {
    %c0_i32 = arith.constant 0 : i32
    %c0_i32_0 = arith.constant 0 : i32
    %c0_i32_1 = arith.constant 0 : i32
    return %c0_i32, %c0_i32_0 : i32, i32
  }
  func.func @transform_2(%arg0: i32) -> (i32, i32) {
    %c0_i32 = arith.constant 0 : i32
    %c0_i32_0 = arith.constant 0 : i32
    return %arg0, %c0_i32 : i32, i32
  }
}

</mosaic_0001>

<llo_original>
// kernel: tpu_custom_call.1
$region0: #{tpu_custom_call.1}
  #allocation0 [shape = 'u32[]', space=smem, size = 0x4, offset = 0x4, fixed_abs, tag = 'smem constant byte address 0x4 - core index']
  #allocation1 [shape = 'u32[144,128]{1,0:T(1,128)}', space=vmem, size = 0x12000, scoped, tag = 'internal scratch']
  %s0 = inlined_call_operand.hbm [shape: f32[4,512], index: 0, kind: input, shape index: {}]
  %s1 = inlined_call_operand.hbm [shape: f32[512,128], index: 1, kind: input, shape index: {}]
  %s2 = inlined_call_operand.hbm [shape: f32[4,128], index: 2, kind: output, shape index: {}]
  %s3 = sld [smem:[#allocation0]]
  $region26: #{tpu_custom_call.1} parent=0
    _
  %s5 = ssub.s32 1, %s3
  %s6 = scalar_select 0, %s5, %s3
  $region1: #{tpu_custom_call.1} parent=0
    #allocation2 [shape = 'u8[8192]{0}', space=vmem, size = 0x2000, scoped, tag = 'input window, operand 0, single buffered']
    #allocation3 [shape = 's32[1]{0}', space=sflag, size = 0x4, scoped, tag = 'scoped memory for tpu_custom_call.1']
    #allocation4 [shape = 's32[1]{0}', space=sflag, size = 0x4, scoped, tag = 'scoped memory for tpu_custom_call.1']
    #allocation5 [shape = 'u8[262144]{0}', space=vmem, size = 0x40000, scoped, tag = 'input window, operand 1, single buffered']
    #allocation6 [shape = 's32[1]{0}', space=sflag, size = 0x4, scoped, tag = 'scoped memory for tpu_custom_call.1']
    #allocation7 [shape = 'u8[2048]{0}', space=vmem, size = 0x800, scoped, tag = 'output window, operand 0, single buffered']
    %7 = vsyncpa [#allocation3], 0
    %8 = vsyncpa [#allocation6], 0
    %9 = vsyncpa [#allocation4], 0
    // Predicated region
    $region2: #{tpu_custom_call.1} parent=1 // pred_check
      _
    $region3: #{tpu_custom_call.1} parent=1 // pred_check_branch
      %11 = sbr.rel (0) target = $region5
    $region4: #{tpu_custom_call.1} parent=1 // pred_region
      %s13 = ssub.s32 256, 256
      %14 = vsyncadd [#allocation3], %s13
      %s16 = sshll.u32 [#allocation2], 4
      %s17 = int_to_ptr.vmem [resolvable:$true] %s16
      %19 = dma.hbm_to_vmem [thread:$0]  %s0, 256, %s17, [#allocation3]
    $region5: #{tpu_custom_call.1} parent=1 // pred_fallthru
      _
    // Predicated region
    $region6: #{tpu_custom_call.1} parent=1 // pred_check
      _
    $region7: #{tpu_custom_call.1} parent=1 // pred_check_branch
      %21 = sbr.rel (0) target = $region9
    $region8: #{tpu_custom_call.1} parent=1 // pred_region
      %s23 = ssub.s32 8192, 8192
      %24 = vsyncadd [#allocation6], %s23
      %s25 = sshll.u32 [#allocation5], 4
      %s26 = int_to_ptr.vmem [resolvable:$true] %s25
      %31 = dma.hbm_to_vmem [thread:$0]  %s1, 8192, %s26, [#allocation6], 128, 128, 8
    $region9: #{tpu_custom_call.1} parent=1 // pred_fallthru
      _
    // Predicated region
    $region10: #{tpu_custom_call.1} parent=1 // pred_check
      _
    $region11: #{tpu_custom_call.1} parent=1 // pred_check_branch
      %33 = sbr.rel (0) target = $region13
    $region12: #{tpu_custom_call.1} parent=1 // pred_region
      %34 = dma.done [#allocation3], 256
    $region13: #{tpu_custom_call.1} parent=1 // pred_fallthru
      _
    // Predicated region
    $region14: #{tpu_custom_call.1} parent=1 // pred_check
      _
    $region15: #{tpu_custom_call.1} parent=1 // pred_check_branch
      %36 = sbr.rel (0) target = $region17
    $region16: #{tpu_custom_call.1} parent=1 // pred_region
      %37 = dma.done [#allocation6], 8192
    $region17: #{tpu_custom_call.1} parent=1 // pred_fallthru
      _
    %v38 = vld [vmem:[#allocation2] sm:$0xff]
    %v39 = vld [vmem:[#allocation2 + $0x8] sm:$0xff]
    %v40 = vld [vmem:[#allocation5] sm:$0xff]
    %v41 = vld [vmem:[#allocation5 + $0x8] sm:$0xff]
    %v42 = vld [vmem:[#allocation5 + $0x10] sm:$0xff]
    %v43 = vld [vmem:[#allocation5 + $0x18] sm:$0xff]
    %v44 = vld [vmem:[#allocation5 + $0x20] sm:$0xff]
    %v45 = vld [vmem:[#allocation5 + $0x28] sm:$0xff]
    %v46 = vld [vmem:[#allocation5 + $0x30] sm:$0xff]
    %v47 = vld [vmem:[#allocation5 + $0x38] sm:$0xff]
    %v48 = vld [vmem:[#allocation5 + $0x40] sm:$0xff]
    %v49 = vld [vmem:[#allocation5 + $0x48] sm:$0xff]
    %v50 = vld [vmem:[#allocation5 + $0x50] sm:$0xff]
    %v51 = vld [vmem:[#allocation5 + $0x58] sm:$0xff]
    %v52 = vld [vmem:[#allocation5 + $0x60] sm:$0xff]
    %v53 = vld [vmem:[#allocation5 + $0x68] sm:$0xff]
    %v54 = vld [vmem:[#allocation5 + $0x70] sm:$0xff]
    %v55 = vld [vmem:[#allocation5 + $0x78] sm:$0xff]
    %v56 = vld [vmem:[#allocation5 + $0x80] sm:$0xff]
    %v57 = vld [vmem:[#allocation5 + $0x88] sm:$0xff]
    %v58 = vld [vmem:[#allocation5 + $0x90] sm:$0xff]
    %v59 = vld [vmem:[#allocation5 + $0x98] sm:$0xff]
    %v60 = vld [vmem:[#allocation5 + $0xa0] sm:$0xff]
    %v61 = vld [vmem:[#allocation5 + $0xa8] sm:$0xff]
    %v62 = vld [vmem:[#allocation5 + $0xb0] sm:$0xff]
    %v63 = vld [vmem:[#allocation5 + $0xb8] sm:$0xff]
    %v64 = vld [vmem:[#allocation5 + $0xc0] sm:$0xff]
    %v65 = vld [vmem:[#allocation5 + $0xc8] sm:$0xff]
    %v66 = vld [vmem:[#allocation5 + $0xd0] sm:$0xff]
    %v67 = vld [vmem:[#allocation5 + $0xd8] sm:$0xff]
    %v68 = vld [vmem:[#allocation5 + $0xe0] sm:$0xff]
    %v69 = vld [vmem:[#allocation5 + $0xe8] sm:$0xff]
    %v70 = vld [vmem:[#allocation5 + $0xf0] sm:$0xff]
    %v71 = vld [vmem:[#allocation5 + $0xf8] sm:$0xff]
    %v72 = vld [vmem:[#allocation5 + $0x100] sm:$0xff]
    %v73 = vld [vmem:[#allocation5 + $0x108] sm:$0xff]
    %v74 = vld [vmem:[#allocation5 + $0x110] sm:$0xff]
    %v75 = vld [vmem:[#allocation5 + $0x118] sm:$0xff]
    %v76 = vld [vmem:[#allocation5 + $0x120] sm:$0xff]
    %v77 = vld [vmem:[#allocation5 + $0x128] sm:$0xff]
    %v78 = vld [vmem:[#allocation5 + $0x130] sm:$0xff]
    %v79 = vld [vmem:[#allocation5 + $0x138] sm:$0xff]
    %v80 = vld [vmem:[#allocation5 + $0x140] sm:$0xff]
    %v81 = vld [vmem:[#allocation5 + $0x148] sm:$0xff]
    %v82 = vld [vmem:[#allocation5 + $0x150] sm:$0xff]
    %v83 = vld [vmem:[#allocation5 + $0x158] sm:$0xff]
    %v84 = vld [vmem:[#allocation5 + $0x160] sm:$0xff]
    %v85 = vld [vmem:[#allocation5 + $0x168] sm:$0xff]
    %v86 = vld [vmem:[#allocation5 + $0x170] sm:$0xff]
    %v87 = vld [vmem:[#allocation5 + $0x178] sm:$0xff]
    %v88 = vld [vmem:[#allocation5 + $0x180] sm:$0xff]
    %v89 = vld [vmem:[#allocation5 + $0x188] sm:$0xff]
    %v90 = vld [vmem:[#allocation5 + $0x190] sm:$0xff]
    %v91 = vld [vmem:[#allocation5 + $0x198] sm:$0xff]
    %v92 = vld [vmem:[#allocation5 + $0x1a0] sm:$0xff]
    %v93 = vld [vmem:[#allocation5 + $0x1a8] sm:$0xff]
    %v94 = vld [vmem:[#allocation5 + $0x1b0] sm:$0xff]
    %v95 = vld [vmem:[#allocation5 + $0x1b8] sm:$0xff]
    %v96 = vld [vmem:[#allocation5 + $0x1c0] sm:$0xff]
    %v97 = vld [vmem:[#allocation5 + $0x1c8] sm:$0xff]
    %v98 = vld [vmem:[#allocation5 + $0x1d0] sm:$0xff]
    %v99 = vld [vmem:[#allocation5 + $0x1d8] sm:$0xff]
    %v100 = vld [vmem:[#allocation5 + $0x1e0] sm:$0xff]
    %v101 = vld [vmem:[#allocation5 + $0x1e8] sm:$0xff]
    %v102 = vld [vmem:[#allocation5 + $0x1f0] sm:$0xff]
    %v103 = vld [vmem:[#allocation5 + $0x1f8] sm:$0xff]
    %v106 = vcombine.high %v38, %v38
    %v107 = vcombine.high %v39, %v39
    %110 = vmatprep.subr.mxu0 0.0
    %111 = vmatpush1.msra.mxu0 %v55
    %112 = vmatprep.subr.mxu0 0.0
    %113 = vmatpush1.msra.mxu0 %v54
    %114 = vmatprep.subr.mxu0 0.0
    %115 = vmatpush1.msra.mxu0 %v53
    %116 = vmatprep.subr.mxu0 0.0
    %117 = vmatpush1.msra.mxu0 %v52
    %118 = vmatprep.subr.mxu0 0.0
    %119 = vmatpush1.msra.mxu0 %v51
    %120 = vmatprep.subr.mxu0 0.0
    %121 = vmatpush1.msra.mxu0 %v50
    %122 = vmatprep.subr.mxu0 0.0
    %123 = vmatpush1.msra.mxu0 %v49
    %124 = vmatprep.subr.mxu0 0.0
    %125 = vmatpush1.msra.mxu0 %v48
    %126 = vmatprep.subr.mxu0 0.0
    %127 = vmatpush1.msra.mxu0 %v47
    %128 = vmatprep.subr.mxu0 0.0
    %129 = vmatpush1.msra.mxu0 %v46
    %130 = vmatprep.subr.mxu0 0.0
    %131 = vmatpush1.msra.mxu0 %v45
    %132 = vmatprep.subr.mxu0 0.0
    %133 = vmatpush1.msra.mxu0 %v44
    %134 = vmatprep.subr.mxu0 0.0
    %135 = vmatpush1.msra.mxu0 %v43
    %136 = vmatprep.subr.mxu0 0.0
    %137 = vmatpush1.msra.mxu0 %v42
    %138 = vmatprep.subr.mxu0 0.0
    %139 = vmatpush1.msra.mxu0 %v41
    %140 = vmatprep.subr.mxu0 0.0
    %141 = vmatpush1.msra.mxu0 %v40
    %142 = vmatprep.subr.mxu0 0.0
    %143 = vmatpush2.msra.mxu0 %v71
    %144 = vmatprep.subr.mxu0 0.0
    %145 = vmatpush2.msra.mxu0 %v70
    %146 = vmatprep.subr.mxu0 0.0
    %147 = vmatpush2.msra.mxu0 %v69
    %148 = vmatprep.subr.mxu0 0.0
    %149 = vmatpush2.msra.mxu0 %v68
    %150 = vmatprep.subr.mxu0 0.0
    %151 = vmatpush2.msra.mxu0 %v67
    %152 = vmatprep.subr.mxu0 0.0
    %153 = vmatpush2.msra.mxu0 %v66
    %154 = vmatprep.subr.mxu0 0.0
    %155 = vmatpush2.msra.mxu0 %v65
    %156 = vmatprep.subr.mxu0 0.0
    %157 = vmatpush2.msra.mxu0 %v64
    %158 = vmatprep.subr.mxu0 0.0
    %159 = vmatpush2.msra.mxu0 %v63
    %160 = vmatprep.subr.mxu0 0.0
    %161 = vmatpush2.msra.mxu0 %v62
    %162 = vmatprep.subr.mxu0 0.0
    %163 = vmatpush2.msra.mxu0 %v61
    %164 = vmatprep.subr.mxu0 0.0
    %165 = vmatpush2.msra.mxu0 %v60
    %166 = vmatprep.subr.mxu0 0.0
    %167 = vmatpush2.msra.mxu0 %v59
    %168 = vmatprep.subr.mxu0 0.0
    %169 = vmatpush2.msra.mxu0 %v58
    %170 = vmatprep.subr.mxu0 0.0
    %171 = vmatpush2.msra.mxu0 %v57
    %172 = vmatprep.subr.mxu0 0.0
    %173 = vmatpush2.msra.mxu0 %v56
    %174 = vmatprep.mubr.f32.mxu0 %v106
    %175 = vmatmul.mubr.f32.gmra.mxu0 %v38
    %v176 = vpop.f32.mrf.mxu0
    %v177 = vadd.f32 0.0, %v176
    %v178 = vpop.f32.mrf.mxu0
    %179 = vdwg.mxu0
    %180 = vmatprep.subr.mxu0 0.0
    %181 = vmatpush1.msra.mxu0 %v87
    %182 = vmatprep.subr.mxu0 0.0
    %183 = vmatpush1.msra.mxu0 %v86
    %184 = vmatprep.subr.mxu0 0.0
    %185 = vmatpush1.msra.mxu0 %v85
    %186 = vmatprep.subr.mxu0 0.0
    %187 = vmatpush1.msra.mxu0 %v84
    %188 = vmatprep.subr.mxu0 0.0
    %189 = vmatpush1.msra.mxu0 %v83
    %190 = vmatprep.subr.mxu0 0.0
    %191 = vmatpush1.msra.mxu0 %v82
    %192 = vmatprep.subr.mxu0 0.0
    %193 = vmatpush1.msra.mxu0 %v81
    %194 = vmatprep.subr.mxu0 0.0
    %195 = vmatpush1.msra.mxu0 %v80
    %196 = vmatprep.subr.mxu0 0.0
    %197 = vmatpush1.msra.mxu0 %v79
    %198 = vmatprep.subr.mxu0 0.0
    %199 = vmatpush1.msra.mxu0 %v78
    %200 = vmatprep.subr.mxu0 0.0
    %201 = vmatpush1.msra.mxu0 %v77
    %202 = vmatprep.subr.mxu0 0.0
    %203 = vmatpush1.msra.mxu0 %v76
    %204 = vmatprep.subr.mxu0 0.0
    %205 = vmatpush1.msra.mxu0 %v75
    %206 = vmatprep.subr.mxu0 0.0
    %207 = vmatpush1.msra.mxu0 %v74
    %208 = vmatprep.subr.mxu0 0.0
    %209 = vmatpush1.msra.mxu0 %v73
    %210 = vmatprep.subr.mxu0 0.0
    %211 = vmatpush1.msra.mxu0 %v72
    %212 = vmatprep.subr.mxu0 0.0
    %213 = vmatpush2.msra.mxu0 %v103
    %214 = vmatprep.subr.mxu0 0.0
    %215 = vmatpush2.msra.mxu0 %v102
    %216 = vmatprep.subr.mxu0 0.0
    %217 = vmatpush2.msra.mxu0 %v101
    %218 = vmatprep.subr.mxu0 0.0
    %219 = vmatpush2.msra.mxu0 %v100
    %220 = vmatprep.subr.mxu0 0.0
    %221 = vmatpush2.msra.mxu0 %v99
    %222 = vmatprep.subr.mxu0 0.0
    %223 = vmatpush2.msra.mxu0 %v98
    %224 = vmatprep.subr.mxu0 0.0
    %225 = vmatpush2.msra.mxu0 %v97
    %226 = vmatprep.subr.mxu0 0.0
    %227 = vmatpush2.msra.mxu0 %v96
    %228 = vmatprep.subr.mxu0 0.0
    %229 = vmatpush2.msra.mxu0 %v95
    %230 = vmatprep.subr.mxu0 0.0
    %231 = vmatpush2.msra.mxu0 %v94
    %232 = vmatprep.subr.mxu0 0.0
    %233 = vmatpush2.msra.mxu0 %v93
    %234 = vmatprep.subr.mxu0 0.0
    %235 = vmatpush2.msra.mxu0 %v92
    %236 = vmatprep.subr.mxu0 0.0
    %237 = vmatpush2.msra.mxu0 %v91
    %238 = vmatprep.subr.mxu0 0.0
    %239 = vmatpush2.msra.mxu0 %v90
    %240 = vmatprep.subr.mxu0 0.0
    %241 = vmatpush2.msra.mxu0 %v89
    %242 = vmatprep.subr.mxu0 0.0
    %243 = vmatpush2.msra.mxu0 %v88
    %244 = vmatprep.mubr.f32.mxu0 %v107
    %245 = vmatmul.mubr.f32.gmra.mxu0 %v39
    %v246 = vpop.f32.mrf.mxu0
    %v247 = vadd.f32 %v177, %v246
    %v248 = vpop.f32.mrf.mxu0
    %249 = vdwg.mxu0
    %250 = vst [vmem:[#allocation7] sm:$0xf] %v247
    // Predicated region
    $region18: #{tpu_custom_call.1} parent=1 // pred_check
      _
    $region19: #{tpu_custom_call.1} parent=1 // pred_check_branch
      %252 = sbr.rel (0) target = $region21
    $region20: #{tpu_custom_call.1} parent=1 // pred_region
      %s254 = ssub.s32 64, 64
      %255 = vsyncadd [#allocation4], %s254
      %s257 = sshll.u32 [#allocation7], 4
      %s258 = int_to_ptr.vmem [resolvable:$true] %s257
      %260 = dma.vmem_to_hbm [thread:$0]  %s258, 64, %s2, [#allocation4]
    $region21: #{tpu_custom_call.1} parent=1 // pred_fallthru
      _
    // Predicated region
    $region22: #{tpu_custom_call.1} parent=1 // pred_check
      _
    $region23: #{tpu_custom_call.1} parent=1 // pred_check_branch
      %262 = sbr.rel (0) target = $region25
    $region24: #{tpu_custom_call.1} parent=1 // pred_region
      %263 = dma.done [#allocation4], 64
    $region25: #{tpu_custom_call.1} parent=1 // pred_fallthru
      _
    %264 = vsyncpa [#allocation3], 1
    %265 = vsyncpa [#allocation6], 1
    %266 = vsyncpa [#allocation4], 1

</llo_original>
